<compile_context>
chip_gen: v7x
topology: tpu7x:2x2x1
jax: 0.10.0
libtpu: 0.0.40
codegen_flags: <defaults>
</compile_context>

<pallas_src>
import numpy as np
import jax
import jax.numpy as jnp
from jax.experimental import pallas as pl
from jax.experimental.pallas import tpu as pltpu

D_MODEL = 32  # latent_dim_pi == latent_dim_vf == d_model


def _identity_kernel(f_ref, o_ref):
    # Bit-exact pass-through: one whole-block VMEM load + one whole-block store.
    o_ref[...] = f_ref[...]


def dummy_mlp_extractor(features):
    """features: (B, d_model) -> (latent_pi, latent_vf), both bit-equal to features."""
    orig_shape = features.shape
    x = features

    # Lane-dense layout for the store path: (-1, 128) when the size allows it.
    lane_dense = (x.size % 128 == 0) and (x.size >= 128)
    if lane_dense:
        x = x.reshape(-1, 128)

    nbytes = x.size * x.dtype.itemsize
    spec = pl.BlockSpec(memory_space=pltpu.MemorySpace.VMEM)  # whole array, no index_map

    out = pl.pallas_call(
        _identity_kernel,
        out_shape=jax.ShapeDtypeStruct(x.shape, x.dtype),
        in_specs=[spec],
        out_specs=spec,
        input_output_aliases={0: 0},            # donate input HBM buffer to the output
        cost_estimate=pl.CostEstimate(
            flops=0, transcendentals=0, bytes_accessed=2 * nbytes),
    )(x)

    if lane_dense:
        out = out.reshape(orig_shape)

    # The module hands the SAME tensor to both heads: return one kernel output twice.
    return out, out


if __name__ == "__main__":
    key = jax.random.PRNGKey(0)

    # Shapes implied by the module: features = (batch, d_model) = (2, 32).
    B = 2
    features = jax.random.normal(key, (B, D_MODEL), jnp.float32)

    latent_pi, latent_vf = dummy_mlp_extractor(features)
    latent_pi = jax.block_until_ready(latent_pi)
    latent_vf = jax.block_until_ready(latent_vf)

    np.testing.assert_array_equal(np.asarray(latent_pi), np.asarray(features))
    np.testing.assert_array_equal(np.asarray(latent_vf), np.asarray(features))

    # Also exercise the lane-dense path (size % 128 == 0): B=8 -> 256 elems -> (2, 128).
    key2 = jax.random.PRNGKey(0)
    features_big = jax.random.normal(key2, (8, D_MODEL), jnp.float32)
    pi_b, vf_b = dummy_mlp_extractor(features_big)
    pi_b = jax.block_until_ready(pi_b)
    vf_b = jax.block_until_ready(vf_b)
    np.testing.assert_array_equal(np.asarray(pi_b), np.asarray(features_big))
    np.testing.assert_array_equal(np.asarray(vf_b), np.asarray(features_big))

    print("KERNEL_OK")
</pallas_src>

<mosaic_0001>
module attributes {stable_mosaic.version = 11 : i64} {
  func.func @_identity_kernel(%arg0: memref<2x32xf32, #tpu.memory_space<vmem>>, %arg1: memref<2x32xf32, #tpu.memory_space<vmem>>) attributes {dimension_semantics = [], scalar_prefetch = 0 : i64, scratch_operands = 0 : i64, tpu.core_type = #tpu.core_type<tc>} {
    %c0 = arith.constant 0 : index
    %c0_0 = arith.constant 0 : index
    %0 = vector.load %arg0[%c0, %c0_0] : memref<2x32xf32, #tpu.memory_space<vmem>>, vector<2x32xf32>
    %c0_1 = arith.constant 0 : index
    %c0_2 = arith.constant 0 : index
    %1 = vector.load %arg1[%c0_1, %c0_2] : memref<2x32xf32, #tpu.memory_space<vmem>>, vector<2x32xf32>
    tpu.vector_store %arg1[%c0_1, %c0_2], %0 {strides = array<i32>} : memref<2x32xf32, #tpu.memory_space<vmem>>, vector<2x32xf32>,
    return
  }
}

</mosaic_0001>

<llo_original>
// kernel: tpu_custom_call.1
$region0: #{tpu_custom_call.1}
  #allocation0 [shape = 'u32[]', space=smem, size = 0x4, offset = 0x4, fixed_abs, tag = 'smem constant byte address 0x4 - core index']
  #allocation1 [shape = 'u32[144,128]{1,0:T(1,128)}', space=vmem, size = 0x12000, scoped, tag = 'internal scratch']
  %s0 = inlined_call_operand.hbm [shape: f32[2,32], index: 0, kind: input, shape index: {}, may-alias: {0,1}]
  %s1 = inlined_call_operand.hbm [shape: f32[2,32], index: 1, kind: output, shape index: {}, may-alias: {0,1}]
  %s2 = sld [smem:[#allocation0]]
  $region18: #{tpu_custom_call.1} parent=0
    _
  %s4 = ssub.s32 1, %s2
  %s5 = scalar_select 0, %s4, %s2
  $region1: #{tpu_custom_call.1} parent=0
    #allocation2 [shape = 'u8[1024]{0}', space=vmem, size = 0x400, scoped, tag = 'input window, operand 0, single buffered']
    #allocation3 [shape = 's32[1]{0}', space=sflag, size = 0x4, scoped, tag = 'scoped memory for tpu_custom_call.1']
    #allocation4 [shape = 's32[1]{0}', space=sflag, size = 0x4, scoped, tag = 'scoped memory for tpu_custom_call.1']
    #allocation5 [shape = 'u8[1024]{0}', space=vmem, size = 0x400, scoped, tag = 'output window, operand 0, single buffered']
    %6 = vsyncpa [#allocation3], 0
    %7 = vsyncpa [#allocation4], 0
    // Predicated region
    $region2: #{tpu_custom_call.1} parent=1 // pred_check
      _
    $region3: #{tpu_custom_call.1} parent=1 // pred_check_branch
      %9 = sbr.rel (0) target = $region5
    $region4: #{tpu_custom_call.1} parent=1 // pred_region
      %s11 = ssub.s32 32, 32
      %12 = vsyncadd [#allocation3], %s11
      %s14 = sshll.u32 [#allocation2], 4
      %s15 = int_to_ptr.vmem [resolvable:$true] %s14
      %17 = dma.hbm_to_vmem [thread:$0]  %s0, 32, %s15, [#allocation3]
    $region5: #{tpu_custom_call.1} parent=1 // pred_fallthru
      _
    // Predicated region
    $region6: #{tpu_custom_call.1} parent=1 // pred_check
      _
    $region7: #{tpu_custom_call.1} parent=1 // pred_check_branch
      %19 = sbr.rel (0) target = $region9
    $region8: #{tpu_custom_call.1} parent=1 // pred_region
      %20 = dma.done [#allocation3], 32
    $region9: #{tpu_custom_call.1} parent=1 // pred_fallthru
      _
    %v21 = vld [vmem:[#allocation2] sm:$0x3]
    %vm22 = vcmask 254976
    %23 = vst.msk [vmem:[#allocation5] sm:$0x3] %vm22, %v21
    // Predicated region
    $region10: #{tpu_custom_call.1} parent=1 // pred_check
      _
    $region11: #{tpu_custom_call.1} parent=1 // pred_check_branch
      %25 = sbr.rel (0) target = $region13
    $region12: #{tpu_custom_call.1} parent=1 // pred_region
      %s27 = ssub.s32 32, 32
      %28 = vsyncadd [#allocation4], %s27
      %s30 = sshll.u32 [#allocation5], 4
      %s31 = int_to_ptr.vmem [resolvable:$true] %s30
      %33 = dma.vmem_to_hbm [thread:$0]  %s31, 32, %s1, [#allocation4]
    $region13: #{tpu_custom_call.1} parent=1 // pred_fallthru
      _
    // Predicated region
    $region14: #{tpu_custom_call.1} parent=1 // pred_check
      _
    $region15: #{tpu_custom_call.1} parent=1 // pred_check_branch
      %35 = sbr.rel (0) target = $region17
    $region16: #{tpu_custom_call.1} parent=1 // pred_region
      %36 = dma.done [#allocation4], 32
    $region17: #{tpu_custom_call.1} parent=1 // pred_fallthru
      _
    %37 = vsyncpa [#allocation3], 1
    %38 = vsyncpa [#allocation4], 1

</llo_original>
